<compile_context>
chip_gen: v6e
topology: v6e:2x2x1
jax: 0.10.0
libtpu: 0.0.40
codegen_flags: <defaults>
</compile_context>

<pallas_src>
import jax
import jax.numpy as jnp
from jax.experimental import pallas as pl
from jax.experimental.pallas import tpu as pltpu

_LANES = 128
_SUBLANES = 8


def _round_up(n, m):
    return ((n + m - 1) // m) * m


def _pad_reshape(v, n_rows):
    """Zero-pad a 1-D vector to n_rows*128 elements, reshape to (n_rows, 128)."""
    target = n_rows * _LANES
    pad = target - v.shape[0]
    if pad:
        v = jnp.pad(v, (0, pad))
    return v.reshape(n_rows, _LANES)


# ---------------------------------------------------------------------------
# Kernels
# ---------------------------------------------------------------------------
def projector_single_kernel(p_ref, r_ref, d_ref, o_ref):
    """Whole problem in one VMEM block: no grid, no double buffering."""
    v = p_ref[...].astype(jnp.float32) - r_ref[...].astype(jnp.float32)     # (R,128)
    px = v * d_ref[0].astype(jnp.float32)
    py = v * d_ref[1].astype(jnp.float32)
    # Sublane-direction adds first (VPU), then a single lane reduce (XLU).
    dx = jnp.sum(jnp.sum(px, axis=0, keepdims=True), axis=1, keepdims=True)  # (1,1)
    dy = jnp.sum(jnp.sum(py, axis=0, keepdims=True), axis=1, keepdims=True)  # (1,1)
    o_ref[...] = jnp.concatenate([dx, dy], axis=1)                           # (1,2)


def projector_grid_kernel(p_ref, r_ref, d_ref, o_ref, acc_ref):
    """Large-D path.

    grid = (2, n_steps): the leading "parallel" axis splits the row range in two
    halves (one per TensorCore on v7x megacore); the trailing "arbitrary" axis is
    the sequential reduction.  Each half accumulates into a merged (2,8,128) f32
    vreg-shaped scratch; the raw partials are written to that half's output slab
    and the tiny cross-lane + cross-half reduction is done outside the kernel.
    """
    k = pl.program_id(1)

    @pl.when(k == 0)
    def _():
        acc_ref[...] = jnp.zeros_like(acc_ref)

    v = p_ref[...].astype(jnp.float32) - r_ref[...].astype(jnp.float32)    # (rows,128)
    rows = v.shape[0]
    g = rows // _SUBLANES
    # Pure VPU multiply-add per step; reduction stays sublane-tiled (no XLU here).
    acc_ref[0] += (v * d_ref[0].astype(jnp.float32)).reshape(
        g, _SUBLANES, _LANES).sum(axis=0)
    acc_ref[1] += (v * d_ref[1].astype(jnp.float32)).reshape(
        g, _SUBLANES, _LANES).sum(axis=0)

    @pl.when(k == pl.num_programs(1) - 1)
    def _():
        o_ref[...] = acc_ref[...].reshape(o_ref.shape)                      # (1,2,8,128)


# ---------------------------------------------------------------------------
# Module wrapper (mirrors the PyTorch nn.Module: fixed params held by the object)
# ---------------------------------------------------------------------------
class ProjectorPallas:
    def __init__(self, reference_point, x, y, *,
                 single_block_max_rows=4096,    # <= ~512K params: one block, no grid
                 rows_per_block_max=4096,       # grid-path block rows (2 MiB f32/stream)
                 store_dtype=None):             # e.g. jnp.bfloat16: ~25% less HBM traffic
        reference_point = jnp.asarray(reference_point)
        x = jnp.asarray(x)
        y = jnp.asarray(y)
        D = reference_point.shape[0]
        assert x.shape == (D,) and y.shape == (D,)
        assert rows_per_block_max % 16 == 0

        if store_dtype is not None:
            reference_point = reference_point.astype(store_dtype)
            x = x.astype(store_dtype)
            y = y.astype(store_dtype)

        self.D = D
        r_min = pl.cdiv(D, _LANES)
        self._single = r_min <= single_block_max_rows

        if self._single:
            R = r_min                 # full-array block: no row-alignment required
            self._n_steps = None
            self._rows_per_block = None
        else:
            # Two halves (one per TensorCore on v7x); block rows sized so that the
            # total row padding never exceeds 2 * n_steps * 16 rows.
            n_steps = pl.cdiv(r_min, 2 * rows_per_block_max)          # steps per half
            rows_per_block = _round_up(pl.cdiv(r_min, 2 * n_steps), 16)
            R = 2 * n_steps * rows_per_block
            self._n_steps = n_steps
            self._rows_per_block = rows_per_block
        self.R = R
        self._padded_len = R * _LANES

        # One-time layout of the fixed parameters (3 of the 4 HBM streams).
        self.ref2 = _pad_reshape(reference_point, R)                   # (R, 128)
        self.dirs = jnp.stack([_pad_reshape(x, R),
                               _pad_reshape(y, R)], axis=0)            # (2, R, 128)

        self._fn = jax.jit(self._forward_impl)

    # -- per-call parameter layout ------------------------------------------
    def _prep_param(self, parameter):
        if parameter.shape[0] == self._padded_len:
            return parameter.reshape(self.R, _LANES)     # contiguous reshape: free
        # TODO(synk): ragged D still pads the (single) parameter stream; a fully
        # copy-free version would mask the tail block in-kernel via a prefetched D.
        return jnp.pad(parameter,
                       (0, self._padded_len - parameter.shape[0])
                       ).reshape(self.R, _LANES)

    def _forward_impl(self, parameter, ref2, dirs):
        p2 = self._prep_param(parameter)
        isz = lambda a: jnp.dtype(a.dtype).itemsize

        if self._single:
            # Whole arrays resident in VMEM once (no grid -> no double buffering).
            vmem_bytes = (self.R * _LANES *
                          (isz(p2) + isz(ref2) + 2 * isz(dirs) + 2 * 4)) + (8 << 20)
            out = pl.pallas_call(
                projector_single_kernel,
                out_shape=jax.ShapeDtypeStruct((1, 2), jnp.float32),
                compiler_params=pltpu.CompilerParams(
                    vmem_limit_bytes=int(vmem_bytes)),
            )(p2, ref2, dirs)
            return out.reshape(2)

        rows = self._rows_per_block
        n_steps = self._n_steps
        step_bytes = rows * _LANES * (isz(p2) + isz(ref2) + 2 * isz(dirs))
        # double-buffered blocks + f32 product temporaries + margin
        vmem_bytes = 2 * step_bytes + 2 * rows * _LANES * 4 + (8 << 20)

        partials = pl.pallas_call(
            projector_grid_kernel,
            out_shape=jax.ShapeDtypeStruct((2, 2, _SUBLANES, _LANES), jnp.float32),
            grid_spec=pltpu.PrefetchScalarGridSpec(
                num_scalar_prefetch=0,
                grid=(2, n_steps),
                in_specs=[
                    pl.BlockSpec((rows, _LANES),
                                 lambda c, k: (c * n_steps + k, 0)),
                    pl.BlockSpec((rows, _LANES),
                                 lambda c, k: (c * n_steps + k, 0)),
                    pl.BlockSpec((2, rows, _LANES),
                                 lambda c, k: (0, c * n_steps + k, 0)),
                ],
                out_specs=pl.BlockSpec((1, 2, _SUBLANES, _LANES),
                                       lambda c, k: (c, 0, 0, 0)),
                scratch_shapes=[pltpu.VMEM((2, _SUBLANES, _LANES), jnp.float32)],
            ),
            compiler_params=pltpu.CompilerParams(
                dimension_semantics=("parallel", "arbitrary"),
                vmem_limit_bytes=int(vmem_bytes)),
        )(p2, ref2, dirs)

        # Tiny epilogue reduce (8 KiB): combines lanes/sublanes and the two halves.
        return partials.sum(axis=(0, 2, 3))                              # (2,)

    def __call__(self, parameter):
        parameter = jnp.asarray(parameter)
        if parameter.shape != (self.D,):
            raise ValueError(f"expected shape ({self.D},), got {parameter.shape}")
        return self._fn(parameter, self.ref2, self.dirs)


# ---------------------------------------------------------------------------
# Self-test
# ---------------------------------------------------------------------------
if __name__ == "__main__":
    key = jax.random.PRNGKey(0)

    # ---- 1) small ragged D (not a multiple of 128): single-block fast path ----
    D = 300
    k_param, k_ref, k_x, k_y = jax.random.split(key, 4)
    parameter = jax.random.normal(k_param, (D,), dtype=jnp.float32)
    reference_point = jax.random.normal(k_ref, (D,), dtype=jnp.float32)
    x_dir = jax.random.normal(k_x, (D,), dtype=jnp.float32)
    y_dir = jax.random.normal(k_y, (D,), dtype=jnp.float32)

    proj = ProjectorPallas(reference_point, x_dir, y_dir)
    projected = jax.block_until_ready(proj(parameter))

    vec = parameter - reference_point
    expected = jnp.stack([jnp.dot(vec, x_dir), jnp.dot(vec, y_dir)])
    assert projected.shape == (2,)
    assert jnp.allclose(projected, expected, rtol=1e-5, atol=1e-5), (projected, expected)

    # ---- 2) aligned D (multiple of 128): copy-free reshape + gridded two-half
    #         reduction path, exercised on small data by shrinking thresholds ----
    D2 = 8192
    k2 = jax.random.split(jax.random.PRNGKey(1), 4)
    p_l = jax.random.normal(k2[0], (D2,), dtype=jnp.float32)
    r_l = jax.random.normal(k2[1], (D2,), dtype=jnp.float32)
    x_l = jax.random.normal(k2[2], (D2,), dtype=jnp.float32)
    y_l = jax.random.normal(k2[3], (D2,), dtype=jnp.float32)

    proj2 = ProjectorPallas(r_l, x_l, y_l,
                            single_block_max_rows=8, rows_per_block_max=16)
    projected2 = jax.block_until_ready(proj2(p_l))
    vec2 = p_l - r_l
    expected2 = jnp.stack([jnp.dot(vec2, x_l), jnp.dot(vec2, y_l)])
    assert jnp.allclose(projected2, expected2, rtol=2e-4, atol=1e-2), (projected2, expected2)

    # ---- 3) ragged D on the gridded path ----
    D3 = 4000
    k3 = jax.random.split(jax.random.PRNGKey(2), 4)
    p3 = jax.random.normal(k3[0], (D3,), dtype=jnp.float32)
    r3 = jax.random.normal(k3[1], (D3,), dtype=jnp.float32)
    x3 = jax.random.normal(k3[2], (D3,), dtype=jnp.float32)
    y3 = jax.random.normal(k3[3], (D3,), dtype=jnp.float32)
    proj3 = ProjectorPallas(r3, x3, y3,
                            single_block_max_rows=8, rows_per_block_max=16)
    projected3 = jax.block_until_ready(proj3(p3))
    vec3 = p3 - r3
    expected3 = jnp.stack([jnp.dot(vec3, x3), jnp.dot(vec3, y3)])
    assert jnp.allclose(projected3, expected3, rtol=2e-4, atol=1e-2), (projected3, expected3)

    # ---- 4) bf16-stored fixed parameters (bandwidth option), single-block ----
    proj4 = ProjectorPallas(reference_point, x_dir, y_dir, store_dtype=jnp.bfloat16)
    projected4 = jax.block_until_ready(proj4(parameter))
    rb = reference_point.astype(jnp.bfloat16).astype(jnp.float32)
    xb = x_dir.astype(jnp.bfloat16).astype(jnp.float32)
    yb = y_dir.astype(jnp.bfloat16).astype(jnp.float32)
    vecb = parameter - rb
    expectedb = jnp.stack([jnp.dot(vecb, xb), jnp.dot(vecb, yb)])
    assert jnp.allclose(projected4, expectedb, rtol=1e-4, atol=1e-3), (projected4, expectedb)

    print("KERNEL_OK")
</pallas_src>

<mosaic_0001>
module attributes {stable_mosaic.version = 11 : i64} {
  func.func @projector_single_kernel(%arg0: memref<3x128xf32, #tpu.memory_space<vmem>>, %arg1: memref<3x128xf32, #tpu.memory_space<vmem>>, %arg2: memref<2x3x128xf32, #tpu.memory_space<vmem>>, %arg3: memref<1x2xf32, #tpu.memory_space<vmem>>) attributes {dimension_semantics = [], scalar_prefetch = 0 : i64, scratch_operands = 0 : i64, tpu.core_type = #tpu.core_type<tc>} {
    %c0 = arith.constant 0 : index
    %c0_0 = arith.constant 0 : index
    %0 = vector.load %arg0[%c0, %c0_0] : memref<3x128xf32, #tpu.memory_space<vmem>>, vector<3x128xf32>
    %c0_1 = arith.constant 0 : index
    %c0_2 = arith.constant 0 : index
    %1 = vector.load %arg1[%c0_1, %c0_2] : memref<3x128xf32, #tpu.memory_space<vmem>>, vector<3x128xf32>
    %2 = arith.subf %0, %1 : vector<3x128xf32>
    %c0_3 = arith.constant 0 : index
    %c0_4 = arith.constant 0 : index
    %c0_5 = arith.constant 0 : index
    %3 = vector.load %arg2[%c0_3, %c0_4, %c0_5] : memref<2x3x128xf32, #tpu.memory_space<vmem>>, vector<1x3x128xf32>
    %4 = vector.shape_cast %3 : vector<1x3x128xf32> to vector<3x128xf32>
    %5 = arith.mulf %2, %4 : vector<3x128xf32>
    %c1 = arith.constant 1 : index
    %c0_6 = arith.constant 0 : index
    %c0_7 = arith.constant 0 : index
    %6 = vector.load %arg2[%c1, %c0_6, %c0_7] : memref<2x3x128xf32, #tpu.memory_space<vmem>>, vector<1x3x128xf32>
    %7 = vector.shape_cast %6 : vector<1x3x128xf32> to vector<3x128xf32>
    %8 = arith.mulf %2, %7 : vector<3x128xf32>
    %cst = arith.constant dense<0.000000e+00> : vector<128xf32>
    %9 = vector.multi_reduction <add>, %5, %cst [0] : vector<3x128xf32> to vector<128xf32>
    %10 = vector.shape_cast %9 : vector<128xf32> to vector<1x128xf32>
    %cst_8 = arith.constant dense<0.000000e+00> : vector<1xf32>
    %11 = vector.multi_reduction <add>, %10, %cst_8 [1] : vector<1x128xf32> to vector<1xf32>
    %12 = vector.shape_cast %11 : vector<1xf32> to vector<1x1xf32>
    %cst_9 = arith.constant dense<0.000000e+00> : vector<128xf32>
    %13 = vector.multi_reduction <add>, %8, %cst_9 [0] : vector<3x128xf32> to vector<128xf32>
    %14 = vector.shape_cast %13 : vector<128xf32> to vector<1x128xf32>
    %cst_10 = arith.constant dense<0.000000e+00> : vector<1xf32>
    %15 = vector.multi_reduction <add>, %14, %cst_10 [1] : vector<1x128xf32> to vector<1xf32>
    %16 = vector.shape_cast %15 : vector<1xf32> to vector<1x1xf32>
    %17 = tpu.concatenate %12, %16 in 1 : vector<1x1xf32>, vector<1x1xf32> -> vector<1x2xf32>
    %c0_11 = arith.constant 0 : index
    %c0_12 = arith.constant 0 : index
    %18 = vector.load %arg3[%c0_11, %c0_12] : memref<1x2xf32, #tpu.memory_space<vmem>>, vector<1x2xf32>
    tpu.vector_store %arg3[%c0_11, %c0_12], %17 {strides = array<i32>} : memref<1x2xf32, #tpu.memory_space<vmem>>, vector<1x2xf32>,
    return
  }
}

</mosaic_0001>

<llo_original>
// kernel: _forward_impl.1
$region0: #{_forward_impl.1}
  #allocation0 [shape = 'u32[]', space=smem, size = 0x4, offset = 0x4, fixed_abs, tag = 'smem constant byte address 0x4 - core index']
  #allocation1 [shape = 'u32[144,128]{1,0:T(1,128)}', space=vmem, size = 0x12000, scoped, tag = 'internal scratch']
  %s0 = inlined_call_operand.vmem [shape: f32[3,128], index: 0, kind: input, shape index: {}]
  %s1 = inlined_call_operand.vmem [shape: f32[3,128], index: 1, kind: input, shape index: {}]
  %s2 = inlined_call_operand.vmem [shape: f32[2,3,128], index: 2, kind: input, shape index: {}]
  %s3 = inlined_call_operand.hbm [shape: f32[1,2], index: 3, kind: output, shape index: {}]
  %s4 = sld [smem:[#allocation0]]
  $region22: #{_forward_impl.1} parent=0
    _
  %s6 = ssub.s32 1, %s4
  %s7 = scalar_select 0, %s6, %s4
  $region1: #{_forward_impl.1} parent=0
    #allocation2 [shape = 'u8[512]{0}', space=vmem, size = 0x400, scoped, tag = 'output window, operand 0, single buffered']
    #allocation3 [shape = 's32[1]{0}', space=sflag, size = 0x4, scoped, tag = 'scoped memory for _forward_impl.1']
    %8 = vsyncpa [#allocation3], 0
    // Predicated region
    $region2: #{_forward_impl.1} parent=1 // pred_check
      _
    $region3: #{_forward_impl.1} parent=1 // pred_check_branch
      %10 = sbr.rel (0) target = $region5
    $region4: #{_forward_impl.1} parent=1 // pred_region
      _
    $region5: #{_forward_impl.1} parent=1 // pred_fallthru
      _
    // Predicated region
    $region6: #{_forward_impl.1} parent=1 // pred_check
      _
    $region7: #{_forward_impl.1} parent=1 // pred_check_branch
      %12 = sbr.rel (0) target = $region9
    $region8: #{_forward_impl.1} parent=1 // pred_region
      _
    $region9: #{_forward_impl.1} parent=1 // pred_fallthru
      _
    // Predicated region
    $region10: #{_forward_impl.1} parent=1 // pred_check
      _
    $region11: #{_forward_impl.1} parent=1 // pred_check_branch
      %14 = sbr.rel (0) target = $region13
    $region12: #{_forward_impl.1} parent=1 // pred_region
      _
    $region13: #{_forward_impl.1} parent=1 // pred_fallthru
      _
    %v15 = vld [vmem:[%s0] sm:$0x7]
    %v16 = vld [vmem:[%s1] sm:$0x7]
    %v17 = vsub.f32 %v15, %v16
    %v18 = vld [vmem:[%s2] sm:$0x7]
    %v19 = vmul.f32 %v17, %v18
    %s20 = scalar_lea.vmem %s2, 4
    %v21 = vld [vmem:[%s20] sm:$0x7]
    %v22 = vmul.f32 %v17, %v21
    %vm23 = vcmask 1042432
    %v24 = vsel %vm23, %v19, 0.0
    %v25 = vrot.slane %v24, 4
    %v26 = vadd.f32 %v24, %v25
    %v27 = vrot.slane %v26, 2
    %v28 = vadd.f32 %v26, %v27
    %v29 = vrot.slane %v28, 1
    %v30 = vadd.f32 %v28, %v29
    %31 = vadd.xlane.f32.xlu0 %v30
    %v32 = vpop.xlane.xlu0 %31
    %v33 = vsel %vm23, %v22, 0.0
    %v34 = vrot.slane %v33, 4
    %v35 = vadd.f32 %v33, %v34
    %v36 = vrot.slane %v35, 2
    %v37 = vadd.f32 %v35, %v36
    %v38 = vrot.slane %v37, 1
    %v39 = vadd.f32 %v37, %v38
    %40 = vadd.xlane.f32.xlu0 %v39
    %v41 = vpop.xlane.xlu0 %40
    %vm42 = vcmask 7168
    %v43 = vsel %vm42, %v32, %v41
    %vm44 = vcmask 8192
    %45 = vst.msk [vmem:[#allocation2] sm:$0x1] %vm44, %v43
    // Predicated region
    $region14: #{_forward_impl.1} parent=1 // pred_check
      _
    $region15: #{_forward_impl.1} parent=1 // pred_check_branch
      %47 = sbr.rel (0) target = $region17
    $region16: #{_forward_impl.1} parent=1 // pred_region
      %s49 = ssub.s32 16, 16
      %50 = vsyncadd [#allocation3], %s49
      %s52 = sshll.u32 [#allocation2], 4
      %s53 = int_to_ptr.vmem [resolvable:$true] %s52
      %55 = dma.vmem_to_hbm [thread:$0]  %s53, 16, %s3, [#allocation3]
    $region17: #{_forward_impl.1} parent=1 // pred_fallthru
      _
    // Predicated region
    $region18: #{_forward_impl.1} parent=1 // pred_check
      _
    $region19: #{_forward_impl.1} parent=1 // pred_check_branch
      %57 = sbr.rel (0) target = $region21
    $region20: #{_forward_impl.1} parent=1 // pred_region
      %58 = dma.done [#allocation3], 16
    $region21: #{_forward_impl.1} parent=1 // pred_fallthru
      _
    %59 = vsyncpa [#allocation3], 1

</llo_original>
